<compile_context>
chip_gen: v7x
topology: tpu7x:2x2x1
jax: 0.10.0
libtpu: 0.0.40
codegen_flags: <defaults>
</compile_context>

<pallas_src>
import functools

import jax
import jax.numpy as jnp
from jax import lax
from jax.experimental import pallas as pl
from jax.experimental.pallas import tpu as pltpu


def _divisors(n):
    ds = set()
    i = 1
    while i * i <= n:
        if n % i == 0:
            ds.add(i)
            ds.add(n // i)
        i += 1
    return sorted(ds)


def _vmem_budget_bytes():
    """Scoped-VMEM budget derived from the chip's physical VMEM capacity."""
    cap = 64 * 1024 * 1024  # conservative default == v7x physical VMEM
    try:
        info = pltpu.get_tpu_info()
        cap = int(getattr(info, "vmem_capacity_bytes", cap) or cap)
    except Exception:
        pass
    # v7x (64 MiB) -> 40 MiB, v5e/v6e (128 MiB) -> 80 MiB scoped limit.
    return max(16 * 1024 * 1024, min(cap * 5 // 8, 96 * 1024 * 1024))


def _pick_tiles(n_outputs, g, t, itemsize, n_batch, *,
                vmem_limit_bytes,
                max_block_bytes=None,
                acc_cap_bytes=96 * 1024,   # keep the f32 accumulator vreg-resident
                max_to=32,
                max_chunks=1024):
    """Pick (TO, TG, BL, CL, n_chunks) satisfying TPU block-shape rules.

    TO: output groups per block (sublane dim).  TG: groups reduced per block.
    BL = TG*T: lane width of the input block (the big, double-buffered DMA).
    CL: lane width of one chunk == lane width of the f32 accumulator.
    """
    reserve = 4 * 1024 * 1024
    # Sublane multiple is dtype dependent: 8 (f32) / 16 (bf16) / 32 (int8/fp8).
    sub = max(8, 32 // max(1, min(4, itemsize)))
    acc_cap_elems = max(128, acc_cap_bytes // 4)

    # ---- output-group tile (second-to-last block dim) ------------------------
    legal_splits = [d for d in _divisors(n_outputs)
                    if d % sub == 0 and d < n_outputs and d <= max_to]
    if n_outputs <= max_to:
        to = n_outputs
        # v7x has 2 TensorCores: make sure the parallel grid has >= 2 steps.
        if n_batch * (n_outputs // to) < 2 and legal_splits:
            to = max(legal_splits)
    else:
        to = max(legal_splits) if legal_splits else n_outputs

    # ---- chunk / accumulator lane width ---------------------------------------
    cl_budget = max(t, acc_cap_elems // to)
    cl_cands = [d * t for d in _divisors(g) if (d * t) % 128 == 0]
    if cl_cands:
        within = [c for c in cl_cands if c <= cl_budget]
        cl = max(within) if within else min(cl_cands)
    else:
        # No divisor of G gives a 128-multiple lane chunk: the only legal lane
        # block is the full row (block last dim must be %128 or == full dim).
        cl = g * t
    tgi = cl // t

    # Harden the fallback: if a single (double-buffered) chunk + accumulator
    # would blow the VMEM budget, shrink TO among legal divisors.
    def _min_footprint(to_):
        return 2 * to_ * cl * itemsize + to_ * cl * 4

    if _min_footprint(to) > vmem_limit_bytes - reserve:
        fits = [d for d in ([n_outputs] + legal_splits)
                if _min_footprint(d) <= vmem_limit_bytes - reserve]
        if fits:
            to = max(fits)

    # ---- chunks per block (size the DMA block for low per-step overhead) -----
    target_block_bytes = max(512 * 1024,
                             min((vmem_limit_bytes - reserve) // 2,
                                 32 * 1024 * 1024))
    if max_block_bytes is not None:
        target_block_bytes = min(target_block_bytes, max_block_bytes)
    rem = g // tgi
    m_cands = [d for d in _divisors(rem)
               if d <= max_chunks and to * d * cl * itemsize <= target_block_bytes]
    m = max(m_cands) if m_cands else 1
    tg = tgi * m
    bl = tg * t
    return to, tg, bl, cl, m


def _average_kernel(x_ref, o_ref, acc_ref, *,
                    chunk_lanes, n_chunks, group, time, lane_align, unroll):
    # x_ref:   (1, TO, BL)   lane-dense input block, BL = n_chunks * chunk_lanes
    # o_ref:   (1, TO, T)    per-group means (written once, at the last k step)
    # acc_ref: (TO, CL) f32  lane-folded partial sums, persistent across k axis
    k = pl.program_id(2)

    @pl.when(k == 0)
    def _():
        acc_ref[...] = jnp.zeros_like(acc_ref)

    if n_chunks <= unroll:
        # Few chunks: fully static, lane-aligned slices + VPU adds.
        acc = acc_ref[...]
        for c in range(n_chunks):
            chunk = x_ref[0, :, c * chunk_lanes:(c + 1) * chunk_lanes]
            acc = acc + chunk.astype(jnp.float32)
        acc_ref[...] = acc
    else:
        # Many chunks: partially-unrolled fori_loop bounds live ranges / code
        # size while the small accumulator stays in vregs (perf-review item).
        def fold(c, acc):
            start = c * chunk_lanes
            if lane_align > 1:
                start = pl.multiple_of(start, lane_align)
            chunk = x_ref[0, :, pl.ds(start, chunk_lanes)]
            return acc + chunk.astype(jnp.float32)

        acc_ref[...] = lax.fori_loop(0, n_chunks, fold, acc_ref[...],
                                     unroll=unroll)

    @pl.when(k == pl.num_programs(2) - 1)
    def _():
        # Lane i of acc only ever saw time step (i % T).  A one-hot (CL, T)
        # matrix on the MXU sums the CL/T slots per time step.  Runs once per
        # output block, so its cost is negligible.
        row = lax.broadcasted_iota(jnp.int32, (chunk_lanes, time), 0)
        col = lax.broadcasted_iota(jnp.int32, (chunk_lanes, time), 1)
        fold_mat = (row % time == col).astype(jnp.float32)
        s = jnp.dot(acc_ref[...], fold_mat, preferred_element_type=jnp.float32)
        o_ref[0, :, :] = (s * (1.0 / group)).astype(o_ref.dtype)


def average_block(spike, n_outputs, count_log=False, *, max_block_bytes=None):
    """Pallas implementation of averageBlock.forward.

    spike: (N, C, H, W, T).  Returns (N, nOutputs, 1, 1, T)
    (or (out, None) when count_log=True, matching the torch module).
    """
    N, C, H, W, T = spike.shape
    total = C * H * W
    assert total % n_outputs == 0, "C*H*W must be divisible by nOutputs"
    G = total // n_outputs

    itemsize = jnp.dtype(spike.dtype).itemsize
    vmem_limit = _vmem_budget_bytes()
    TO, TG, BL, CL, n_chunks = _pick_tiles(
        n_outputs, G, T, itemsize, N,
        vmem_limit_bytes=vmem_limit, max_block_bytes=max_block_bytes)
    lane_align = 128 if CL % 128 == 0 else 1

    # Glue reshape (free / contiguous): (N, nOutputs, G*T) — lane-dense layout.
    x = spike.reshape(N, n_outputs, G * T)

    grid = (N, n_outputs // TO, G // TG)

    kernel = functools.partial(
        _average_kernel, chunk_lanes=CL, n_chunks=n_chunks, group=G, time=T,
        lane_align=lane_align, unroll=8)

    out = pl.pallas_call(
        kernel,
        out_shape=jax.ShapeDtypeStruct((N, n_outputs, T), spike.dtype),
        grid=grid,
        in_specs=[
            # TODO(synk): sweep pipeline_mode=pl.Buffered(3) on v7x once blocks
            # are enlarged; double-buffering already hides the DMA on v5e/v6e.
            pl.BlockSpec((1, TO, BL), lambda n, j, k: (n, j, k)),
        ],
        out_specs=pl.BlockSpec((1, TO, T), lambda n, j, k: (n, j, 0)),
        scratch_shapes=[pltpu.VMEM((TO, CL), jnp.float32)],
        compiler_params=pltpu.CompilerParams(
            dimension_semantics=("parallel", "parallel", "arbitrary"),
            vmem_limit_bytes=vmem_limit,
        ),
        cost_estimate=pl.CostEstimate(
            flops=N * n_outputs * G * T,
            transcendentals=0,
            bytes_accessed=x.size * itemsize + N * n_outputs * T * itemsize,
        ),
    )(x)

    out = out.reshape(N, n_outputs, 1, 1, T)
    if count_log:
        # TODO(synk): the torch module only ever returns None for the count log.
        return (out, None)
    return out


if __name__ == "__main__":
    key = jax.random.PRNGKey(0)

    def _check(n, c, h, w, t, n_outputs, max_block_bytes=None):
        k = jax.random.fold_in(key, c * h * w * t + n_outputs)
        spike = (jax.random.uniform(k, (n, c, h, w, t), dtype=jnp.float32) < 0.3
                 ).astype(jnp.float32)
        fn = jax.jit(functools.partial(average_block, n_outputs=n_outputs,
                                       max_block_bytes=max_block_bytes))
        out = jax.block_until_ready(fn(spike))
        ref = jnp.mean(spike.reshape(n, n_outputs, -1, 1, t), axis=2,
                       keepdims=True)
        assert out.shape == (n, n_outputs, 1, 1, t), out.shape
        assert jnp.allclose(out, ref, atol=1e-6), "mismatch vs reference"

    # Small shape matching the module (batch=2, channels=4, spatial=4x4, T=8).
    _check(2, 4, 4, 4, 8, n_outputs=4)
    # Larger reduction: exercises the partially-unrolled fori_loop chunk fold.
    _check(1, 8, 128, 64, 8, n_outputs=8)
    # Forced small blocks: exercises the multi-step reduction (k) grid axis.
    _check(1, 8, 128, 64, 8, n_outputs=8, max_block_bytes=256 * 1024)

    print("KERNEL_OK")
</pallas_src>

<mosaic_0001>
module attributes {stable_mosaic.version = 11 : i64} {
  func.func @_average_kernel(%arg0: i32, %arg1: i32, %arg2: i32, %arg3: memref<1x4x128xf32, #tpu.memory_space<vmem>>, %arg4: memref<1x4x8xf32, #tpu.memory_space<vmem>>, %arg5: memref<4x128xf32, #tpu.memory_space<vmem>>) attributes {dimension_semantics = [#tpu.dimension_semantics<parallel>, #tpu.dimension_semantics<parallel>, #tpu.dimension_semantics<arbitrary>], iteration_bounds = array<i64: 2, 1, 1>, scalar_prefetch = 0 : i64, scratch_operands = 1 : i64, tpu.core_type = #tpu.core_type<tc>, window_params = [{transform_indices = @transform_0, window_bounds = array<i64: 1, 4, 128>}, {transform_indices = @transform_1, window_bounds = array<i64: 1, 4, 8>}]} {
    %c0_i32 = arith.constant 0 : i32
    %0 = arith.cmpi eq, %arg2, %c0_i32 : i32
    %1 = arith.extui %0 : i1 to i32
    %c0_i32_0 = arith.constant 0 : i32
    %2 = arith.cmpi ne, %1, %c0_i32_0 : i32
    scf.if %2 {
      %cst = arith.constant 0.000000e+00 : f32
      %11 = vector.broadcast %cst : f32 to vector<4x128xf32>
      %c0_9 = arith.constant 0 : index
      %c0_10 = arith.constant 0 : index
      %12 = vector.load %arg5[%c0_9, %c0_10] : memref<4x128xf32, #tpu.memory_space<vmem>>, vector<4x128xf32>
      tpu.vector_store %arg5[%c0_9, %c0_10], %11 {strides = array<i32>} : memref<4x128xf32, #tpu.memory_space<vmem>>, vector<4x128xf32>,
    } else {
    }
    %c0 = arith.constant 0 : index
    %c0_1 = arith.constant 0 : index
    %3 = vector.load %arg5[%c0, %c0_1] : memref<4x128xf32, #tpu.memory_space<vmem>>, vector<4x128xf32>
    %c0_2 = arith.constant 0 : index
    %c0_3 = arith.constant 0 : index
    %c0_4 = arith.constant 0 : index
    %4 = vector.load %arg3[%c0_2, %c0_3, %c0_4] : memref<1x4x128xf32, #tpu.memory_space<vmem>>, vector<1x4x128xf32>
    %5 = vector.shape_cast %4 : vector<1x4x128xf32> to vector<4x128xf32>
    %6 = arith.addf %3, %5 : vector<4x128xf32>
    %c0_5 = arith.constant 0 : index
    %c0_6 = arith.constant 0 : index
    %7 = vector.load %arg5[%c0_5, %c0_6] : memref<4x128xf32, #tpu.memory_space<vmem>>, vector<4x128xf32>
    tpu.vector_store %arg5[%c0_5, %c0_6], %6 {strides = array<i32>} : memref<4x128xf32, #tpu.memory_space<vmem>>, vector<4x128xf32>,
    %c0_i32_7 = arith.constant 0 : i32
    %8 = arith.cmpi eq, %arg2, %c0_i32_7 : i32
    %9 = arith.extui %8 : i1 to i32
    %c0_i32_8 = arith.constant 0 : i32
    %10 = arith.cmpi ne, %9, %c0_i32_8 : i32
    scf.if %10 {
      %11 = tpu.iota {dimensions = array<i32: 0>} : vector<128x8xi32>
      %12 = tpu.iota {dimensions = array<i32: 1>} : vector<128x8xi32>
      %c8_i32 = arith.constant 8 : i32
      %c0_i32_9 = arith.constant 0 : i32
      %13 = arith.cmpi eq, %c8_i32, %c0_i32_9 : i32
      %c1_i32 = arith.constant 1 : i32
      %14 = arith.select %13, %c1_i32, %c8_i32 : i32
      %15 = vector.broadcast %14 : i32 to vector<128x8xi32>
      %16 = arith.remsi %11, %15 : vector<128x8xi32>
      %c0_i32_10 = arith.constant 0 : i32
      %17 = vector.broadcast %c0_i32_10 : i32 to vector<128x8xi32>
      %18 = arith.cmpi ne, %16, %17 : vector<128x8xi32>
      %c0_i32_11 = arith.constant 0 : i32
      %19 = vector.broadcast %c0_i32_11 : i32 to vector<128x8xi32>
      %20 = arith.cmpi slt, %16, %19 : vector<128x8xi32>
      %c0_i32_12 = arith.constant 0 : i32
      %21 = arith.cmpi slt, %14, %c0_i32_12 : i32
      %22 = vector.broadcast %21 : i1 to vector<128x8xi1>
      %23 = vector.broadcast %22 : vector<128x8xi1> to vector<128x8xi1>
      %24 = arith.xori %20, %23 : vector<128x8xi1>
      %25 = arith.andi %24, %18 : vector<128x8xi1>
      %26 = vector.broadcast %14 : i32 to vector<128x8xi32>
      %27 = arith.addi %16, %26 : vector<128x8xi32>
      %28 = arith.select %25, %27, %16 : vector<128x8xi1>, vector<128x8xi32>
      %29 = arith.cmpi eq, %28, %12 : vector<128x8xi32>
      %30 = arith.extui %29 : vector<128x8xi1> to vector<128x8xi32>
      %31 = arith.sitofp %30 : vector<128x8xi32> to vector<128x8xf32>
      %c0_13 = arith.constant 0 : index
      %c0_14 = arith.constant 0 : index
      %32 = vector.load %arg5[%c0_13, %c0_14] : memref<4x128xf32, #tpu.memory_space<vmem>>, vector<4x128xf32>
      %cst = arith.constant dense<0.000000e+00> : vector<4x8xf32>
      %33 = tpu.matmul %32, %31, %cst {dimension_numbers = #tpu.dot_dimension_numbers<[1], [0], [0], [1], [0, 0, 1, 1], [], []>} : vector<4x128xf32>, vector<128x8xf32>, vector<4x8xf32> -> vector<4x8xf32>
      %cst_15 = arith.constant 6.250000e-02 : f32
      %34 = vector.broadcast %cst_15 : f32 to vector<4x8xf32>
      %35 = arith.mulf %33, %34 : vector<4x8xf32>
      %c0_16 = arith.constant 0 : index
      %c0_17 = arith.constant 0 : index
      %c0_18 = arith.constant 0 : index
      %36 = vector.load %arg4[%c0_16, %c0_17, %c0_18] : memref<1x4x8xf32, #tpu.memory_space<vmem>>, vector<1x4x8xf32>
      %37 = vector.shape_cast %36 : vector<1x4x8xf32> to vector<4x8xf32>
      %38 = vector.shape_cast %35 : vector<4x8xf32> to vector<1x4x8xf32>
      tpu.vector_store %arg4[%c0_16, %c0_17, %c0_18], %38 {strides = array<i32>} : memref<1x4x8xf32, #tpu.memory_space<vmem>>, vector<1x4x8xf32>,
    } else {
    }
    return
  }
  func.func @transform_0(%arg0: i32, %arg1: i32, %arg2: i32) -> (i32, i32, i32) {
    %c0_i32 = arith.constant 0 : i32
    return %arg0, %arg1, %arg2 : i32, i32, i32
  }
  func.func @transform_1(%arg0: i32, %arg1: i32, %arg2: i32) -> (i32, i32, i32) {
    %c0_i32 = arith.constant 0 : i32
    %c0_i32_0 = arith.constant 0 : i32
    return %arg0, %arg1, %c0_i32 : i32, i32, i32
  }
}

</mosaic_0001>

<llo_original>
// kernel: average_block.1
$region0: #{average_block.1}
  #allocation0 [shape = 'u32[]', space=smem, size = 0x4, offset = 0x4, fixed_abs, tag = 'smem constant byte address 0x4 - core index']
  #allocation1 [shape = 'u32[144,128]{1,0:T(1,128)}', space=vmem, size = 0x12000, scoped, tag = 'internal scratch']
  #allocation2 [shape = 'f32[4,128]{1,0:T(4,128)}', space=vmem, size = 0x800, scoped, tag = 'scratch operand']
  %s0 = inlined_call_operand.vmem [shape: f32[2,4,128], index: 0, kind: input, shape index: {}]
  %s1 = inlined_call_operand.hbm [shape: f32[2,4,8], index: 1, kind: output, shape index: {}]
  %s2 = sld [smem:[#allocation0]]
  $region45: #{average_block.1} parent=0
    _
  %s4 = ssub.s32 1, %s2
  %s5 = scalar_select 0, %s4, %s2
  $region1: #{average_block.1} parent=0
    #allocation3 [shape = 'u8[4096]{0}', space=vmem, size = 0x1000, scoped, tag = 'output window, operand 0']
    #allocation4 [shape = 's32[2]{0}', space=sflag, size = 0x8, scoped, tag = 'scoped memory for average_block.1']
    %6 = vsyncpa [#allocation4], 0
    %s7 = scalar_lea.sflag [#allocation4], 1
    %8 = vsyncpa %s7, 0
    loop: start=0, step=1, limit=4
    $region2: #{average_block.1} parent=1 // loop_pre_header
      _
    $region3: #{average_block.1} parent=1 // loop_header
      %s10 = sphi 0, %s14
      %p11 = scmp.ge.s32.totalorder %s10, 4
      %s17 = sphi 0, %s36
      %s18 = sphi 0, %s32
      %s19 = sphi 0, %s28
      %s20 = sphi 0, %s17
      %s21 = sphi 0, %s18
      %s22 = sphi 0, %s19
      %s23 = sphi 0, %s20
      %s24 = sphi 0, %s21
      %s25 = sphi 0, %s22
      %s43 = sphi 0, %s45
      %s46 = sphi 0, %s43
      %s47 = sphi 0, %s46
      %s63 = sphi 0, %s47
      %s71 = sphi 0, %s73
      %s74 = sphi 0, %s71
      %s75 = sphi 0, %s74
      %s91 = sphi 0, %s75
    $region4: #{average_block.1} parent=1 // loop_header_branch
      %13 = sbr.rel (%p11) target = $region8
    $region5: #{average_block.1} parent=1 // loop_body
      %s15 = ssub.s32 %s10, 1
      %s16 = ssub.s32 %s10, 2
      %s26 = sadd.s32 1, %s19
      %p27 = scmp.ge.s32.totalorder %s26, 1
      %s28 = scalar_select %p27, 0, %s26
      %s29 = sadd.s32 1, %s18
      %s30 = scalar_select %p27, %s29, %s18
      %p31 = scmp.ge.s32.totalorder %s30, 1
      %s32 = scalar_select %p31, 0, %s30
      %s33 = sadd.s32 1, %s17
      %s34 = scalar_select %p31, %s33, %s17
      %p35 = scmp.ge.s32.totalorder %s34, 2
      %s36 = scalar_select %p35, 0, %s34
      %s37 = ssub.s32 %s17, %s36
      %s38 = ssub.s32 %s18, %s32
      %s39 = sor.u32 %s37, %s38
      %s40 = ssub.s32 %s19, %s28
      %s41 = sor.u32 %s39, %s40
      %p42 = scmp.eq.s32.totalorder %s41, 0
      %s44 = sadd.s32 %s43, 1
      %s45 = scalar_select %p42, %s43, %s44
      %p48 = pneg %p42
      %p49 = scmp.eq.s32.totalorder %s10, 1
      %p50 = por %p48, %p49
      %p51 = scmp.ne.s32.totalorder %s43, %s46
      %p52 = scmp.eq.s32.totalorder %s10, 0
      %p53 = por %p51, %p52
      %p54 = scmp.ne.s32.totalorder %s43, %s46
      %p55 = scmp.eq.s32.totalorder %s15, 1
      %p56 = por %p54, %p55
      %p57 = scmp.ne.s32.totalorder %s46, %s47
      %p58 = scmp.eq.s32.totalorder %s15, 0
      %p59 = por %p57, %p58
      %p60 = scmp.ne.s32.totalorder %s46, %s47
      %p61 = scmp.eq.s32.totalorder %s16, 1
      %p62 = por %p60, %p61
      %p64 = scmp.ne.s32.totalorder %s47, %s63
      %p65 = scmp.eq.s32.totalorder %s16, 0
      %p66 = por %p64, %p65
      %s67 = ssub.s32 %s17, %s36
      %s68 = ssub.s32 %s18, %s32
      %s69 = sor.u32 %s67, %s68
      %p70 = scmp.eq.s32.totalorder %s69, 0
      %s72 = sadd.s32 %s71, 1
      %s73 = scalar_select %p70, %s71, %s72
      %p76 = pneg %p70
      %p77 = scmp.eq.s32.totalorder %s10, 1
      %p78 = por %p76, %p77
      %p79 = scmp.ne.s32.totalorder %s71, %s74
      %p80 = scmp.eq.s32.totalorder %s10, 0
      %p81 = por %p79, %p80
      %p82 = scmp.ne.s32.totalorder %s71, %s74
      %p83 = scmp.eq.s32.totalorder %s15, 1
      %p84 = por %p82, %p83
      %p85 = scmp.ne.s32.totalorder %s74, %s75
      %p86 = scmp.eq.s32.totalorder %s15, 0
      %p87 = por %p85, %p86
      %p88 = scmp.ne.s32.totalorder %s74, %s75
      %p89 = scmp.eq.s32.totalorder %s16, 1
      %p90 = por %p88, %p89
      %p92 = scmp.ne.s32.totalorder %s75, %s91
      %p93 = scmp.eq.s32.totalorder %s16, 0
      %p94 = por %p92, %p93
      %p95 = scmp.le.s32.totalorder 1, %s10
      %p96 = scmp.lt.s32.totalorder %s10, 3
      %p97 = pnand %p95, %p96
      %p98 = pneg %p97
      // Predicated region
      $region9: #{average_block.1} parent=5 // pred_check
        _
      $region10: #{average_block.1} parent=5 // pred_check_branch
        %100 = sbr.rel (%p97) target = $region12
      $region11: #{average_block.1} parent=5 // pred_region
        %s101 = ssub.s32 %s10, 1
      $region12: #{average_block.1} parent=5 // pred_fallthru
        _
      %p102 = scmp.lt.s32.totalorder %s10, 2
      // Predicated region
      $region13: #{average_block.1} parent=5 // pred_check
        %p103 = pneg %p102
      $region14: #{average_block.1} parent=5 // pred_check_branch
        %105 = sbr.rel (%p103) target = $region16
      $region15: #{average_block.1} parent=5 // pred_region
        // Predicated region
        $region17: #{average_block.1} parent=15 // pred_check
          %p106 = pneg %p53
        $region18: #{average_block.1} parent=15 // pred_check_branch
          %108 = sbr.rel (%p106) target = $region20
        $region19: #{average_block.1} parent=15 // pred_region
          %p109 = scmp.lt.s32.totalorder %s17, 1
          %s110 = scalar_select %p109, %s17, 1
          %p111 = scmp.lt.s32.totalorder %s18, 0
          %s112 = scalar_select %p111, %s18, 0
          %p113 = scmp.lt.s32.totalorder %s19, 0
          %s114 = scalar_select %p113, %s19, 0
          %s115 = sadd.s32 %s114, %s112
          %s116 = sadd.s32 %s115, %s110
          %s117 = smul.addr %s116, 4
          %s118 = scalar_lea.vmem %s0, %s117
        $region20: #{average_block.1} parent=15 // pred_fallthru
          _
      $region16: #{average_block.1} parent=5 // pred_fallthru
        _
      %p119 = scmp.le.s32.totalorder 1, %s10
      %p120 = scmp.lt.s32.totalorder %s10, 3
      %p121 = pnand %p119, %p120
      %p122 = pneg %p121
      // Predicated region
      $region21: #{average_block.1} parent=5 // pred_check
        _
      $region22: #{average_block.1} parent=5 // pred_check_branch
        %124 = sbr.rel (%p121) target = $region24
      $region23: #{average_block.1} parent=5 // pred_region
        %s125 = ssub.s32 %s10, 1
        %p126 = scmp.lt.s32.totalorder %s20, 1
        %s127 = scalar_select %p126, %s20, 1
        %p128 = scmp.lt.s32.totalorder %s21, 0
        %s129 = scalar_select %p128, %s21, 0
        %p130 = scmp.lt.s32.totalorder %s22, 0
        %s131 = scalar_select %p130, %s22, 0
        %s132 = sadd.s32 %s131, %s129
        %s133 = sadd.s32 %s132, %s127
        %s134 = smul.addr %s133, 4
        %s135 = scalar_lea.vmem %s0, %s134
        %p136 = pneg %p59
        %p137 = pneg %p56
        %p138 = pneg %p87
        %p139 = pneg %p84
        %s140 = sand.u32 %s74, 1
        %s141 = scalar_lea.sflag [#allocation4], %s140
        %s142 = sand.u32 %s74, 1
        %s143 = smul.addr %s142, 4
        %s144 = scalar_lea.vmem [#allocation3], %s143
        %p145 = scmp.lt.s32.totalorder %s20, 1
        %s146 = scalar_select %p145, %s20, 1
        %p147 = scmp.lt.s32.totalorder %s21, 0
        %s148 = scalar_select %p147, %s21, 0
        %p149 = scmp.lt.s32.totalorder %s22, 0
        %s150 = scalar_select %p149, %s22, 0
        %s151 = sadd.s32 %s150, %s148
        %s152 = sadd.s32 %s151, %s146
        %s153 = smul.addr %s152, 4
        %s154 = scalar_lea.vmem %s0, %s153
        %p155 = scmp.eq.s32.totalorder %s22, 0
        // Predicated region
        $region25: #{average_block.1} parent=23 // pred_check
          %p156 = pneg %p155
        $region26: #{average_block.1} parent=23 // pred_check_branch
          %158 = sbr.rel (%p156) target = $region28
        $region27: #{average_block.1} parent=23 // pred_region
          %159 = vst [vmem:[#allocation2] sm:$0xf] 0.0
        $region28: #{average_block.1} parent=23 // pred_fallthru
          _
        %v160 = vld [vmem:[#allocation2] sm:$0xf]
        %v161 = vld [vmem:[%s154] sm:$0xf]
        %v162 = vadd.f32 %v160, %v161
        %163 = vst [vmem:[#allocation2] sm:$0xf] %v162
        // Predicated region
        $region29: #{average_block.1} parent=23 // pred_check
          %p164 = pneg %p155
        $region30: #{average_block.1} parent=23 // pred_check_branch
          %166 = sbr.rel (%p164) target = $region32
        $region31: #{average_block.1} parent=23 // pred_region
          %v167 = vlaneseq
          %v168 = vshrl.u32 %v167, 7
          %v169 = vadd.s32 %v168, 8
          %v170 = vadd.s32 %v168, 16
          %v171 = vadd.s32 %v168, 24
          %v172 = vadd.s32 %v168, 32
          %v173 = vadd.s32 %v168, 40
          %v174 = vadd.s32 %v168, 48
          %v175 = vadd.s32 %v168, 56
          %v176 = vadd.s32 %v168, 64
          %v177 = vadd.s32 %v168, 72
          %v178 = vadd.s32 %v168, 80
          %v179 = vadd.s32 %v168, 88
          %v180 = vadd.s32 %v168, 96
          %v181 = vadd.s32 %v168, 104
          %v182 = vadd.s32 %v168, 112
          %v183 = vadd.s32 %v168, 120
          %v184 = vlaneseq
          %v185 = vand.u32 %v184, 127
          %vm186 = vcmp.lt.s32.totalorder %v168, 0
          %v187 = vsub.s32 0, %v168
          %v188 = vsel %vm186, %v187, %v168
          %v189 = vshrl.u32 %v188, 3
          %v190 = vand.u32 %v188, 7
          %v191 = vsub.s32 0, %v190
          %v192 = vsel %vm186, %v191, %v190
          %vm193 = vcmp.lt.s32.totalorder %v169, 0
          %v194 = vsub.s32 0, %v169
          %v195 = vsel %vm193, %v194, %v169
          %v196 = vshrl.u32 %v195, 3
          %v197 = vand.u32 %v195, 7
          %v198 = vsub.s32 0, %v197
          %v199 = vsel %vm193, %v198, %v197
          %vm200 = vcmp.lt.s32.totalorder %v170, 0
          %v201 = vsub.s32 0, %v170
          %v202 = vsel %vm200, %v201, %v170
          %v203 = vshrl.u32 %v202, 3
          %v204 = vand.u32 %v202, 7
          %v205 = vsub.s32 0, %v204
          %v206 = vsel %vm200, %v205, %v204
          %vm207 = vcmp.lt.s32.totalorder %v171, 0
          %v208 = vsub.s32 0, %v171
          %v209 = vsel %vm207, %v208, %v171
          %v210 = vshrl.u32 %v209, 3
          %v211 = vand.u32 %v209, 7
          %v212 = vsub.s32 0, %v211
          %v213 = vsel %vm207, %v212, %v211
          %vm214 = vcmp.lt.s32.totalorder %v172, 0
          %v215 = vsub.s32 0, %v172
          %v216 = vsel %vm214, %v215, %v172
          %v217 = vshrl.u32 %v216, 3
          %v218 = vand.u32 %v216, 7
          %v219 = vsub.s32 0, %v218
          %v220 = vsel %vm214, %v219, %v218
          %vm221 = vcmp.lt.s32.totalorder %v173, 0
          %v222 = vsub.s32 0, %v173
          %v223 = vsel %vm221, %v222, %v173
          %v224 = vshrl.u32 %v223, 3
          %v225 = vand.u32 %v223, 7
          %v226 = vsub.s32 0, %v225
          %v227 = vsel %vm221, %v226, %v225
          %vm228 = vcmp.lt.s32.totalorder %v174, 0
          %v229 = vsub.s32 0, %v174
          %v230 = vsel %vm228, %v229, %v174
          %v231 = vshrl.u32 %v230, 3
          %v232 = vand.u32 %v230, 7
          %v233 = vsub.s32 0, %v232
          %v234 = vsel %vm228, %v233, %v232
          %vm235 = vcmp.lt.s32.totalorder %v175, 0
          %v236 = vsub.s32 0, %v175
          %v237 = vsel %vm235, %v236, %v175
          %v238 = vshrl.u32 %v237, 3
          %v239 = vand.u32 %v237, 7
          %v240 = vsub.s32 0, %v239
          %v241 = vsel %vm235, %v240, %v239
          %vm242 = vcmp.lt.s32.totalorder %v176, 0
          %v243 = vsub.s32 0, %v176
          %v244 = vsel %vm242, %v243, %v176
          %v245 = vshrl.u32 %v244, 3
          %v246 = vand.u32 %v244, 7
          %v247 = vsub.s32 0, %v246
          %v248 = vsel %vm242, %v247, %v246
          %vm249 = vcmp.lt.s32.totalorder %v177, 0
          %v250 = vsub.s32 0, %v177
          %v251 = vsel %vm249, %v250, %v177
          %v252 = vshrl.u32 %v251, 3
          %v253 = vand.u32 %v251, 7
          %v254 = vsub.s32 0, %v253
          %v255 = vsel %vm249, %v254, %v253
          %vm256 = vcmp.lt.s32.totalorder %v178, 0
          %v257 = vsub.s32 0, %v178
          %v258 = vsel %vm256, %v257, %v178
          %v259 = vshrl.u32 %v258, 3
          %v260 = vand.u32 %v258, 7
          %v261 = vsub.s32 0, %v260
          %v262 = vsel %vm256, %v261, %v260
          %vm263 = vcmp.lt.s32.totalorder %v179, 0
          %v264 = vsub.s32 0, %v179
          %v265 = vsel %vm263, %v264, %v179
          %v266 = vshrl.u32 %v265, 3
          %v267 = vand.u32 %v265, 7
          %v268 = vsub.s32 0, %v267
          %v269 = vsel %vm263, %v268, %v267
          %vm270 = vcmp.lt.s32.totalorder %v180, 0
          %v271 = vsub.s32 0, %v180
          %v272 = vsel %vm270, %v271, %v180
          %v273 = vshrl.u32 %v272, 3
          %v274 = vand.u32 %v272, 7
          %v275 = vsub.s32 0, %v274
          %v276 = vsel %vm270, %v275, %v274
          %vm277 = vcmp.lt.s32.totalorder %v181, 0
          %v278 = vsub.s32 0, %v181
          %v279 = vsel %vm277, %v278, %v181
          %v280 = vshrl.u32 %v279, 3
          %v281 = vand.u32 %v279, 7
          %v282 = vsub.s32 0, %v281
          %v283 = vsel %vm277, %v282, %v281
          %vm284 = vcmp.lt.s32.totalorder %v182, 0
          %v285 = vsub.s32 0, %v182
          %v286 = vsel %vm284, %v285, %v182
          %v287 = vshrl.u32 %v286, 3
          %v288 = vand.u32 %v286, 7
          %v289 = vsub.s32 0, %v288
          %v290 = vsel %vm284, %v289, %v288
          %vm291 = vcmp.lt.s32.totalorder %v183, 0
          %v292 = vsub.s32 0, %v183
          %v293 = vsel %vm291, %v292, %v183
          %v294 = vshrl.u32 %v293, 3
          %v295 = vand.u32 %v293, 7
          %v296 = vsub.s32 0, %v295
          %v297 = vsel %vm291, %v296, %v295
          %vm298 = vcmp.ne.s32.totalorder %v192, 0
          %vm299 = vcmp.ne.s32.totalorder %v199, 0
          %vm300 = vcmp.ne.s32.totalorder %v206, 0
          %vm301 = vcmp.ne.s32.totalorder %v213, 0
          %vm302 = vcmp.ne.s32.totalorder %v220, 0
          %vm303 = vcmp.ne.s32.totalorder %v227, 0
          %vm304 = vcmp.ne.s32.totalorder %v234, 0
          %vm305 = vcmp.ne.s32.totalorder %v241, 0
          %vm306 = vcmp.ne.s32.totalorder %v248, 0
          %vm307 = vcmp.ne.s32.totalorder %v255, 0
          %vm308 = vcmp.ne.s32.totalorder %v262, 0
          %vm309 = vcmp.ne.s32.totalorder %v269, 0
          %vm310 = vcmp.ne.s32.totalorder %v276, 0
          %vm311 = vcmp.ne.s32.totalorder %v283, 0
          %vm312 = vcmp.ne.s32.totalorder %v290, 0
          %vm313 = vcmp.ne.s32.totalorder %v297, 0
          %vm314 = vcmp.lt.s32.totalorder %v192, 0
          %vm315 = vcmp.lt.s32.totalorder %v199, 0
          %vm316 = vcmp.lt.s32.totalorder %v206, 0
          %vm317 = vcmp.lt.s32.totalorder %v213, 0
          %vm318 = vcmp.lt.s32.totalorder %v220, 0
          %vm319 = vcmp.lt.s32.totalorder %v227, 0
          %vm320 = vcmp.lt.s32.totalorder %v234, 0
          %vm321 = vcmp.lt.s32.totalorder %v241, 0
          %vm322 = vcmp.lt.s32.totalorder %v248, 0
          %vm323 = vcmp.lt.s32.totalorder %v255, 0
          %vm324 = vcmp.lt.s32.totalorder %v262, 0
          %vm325 = vcmp.lt.s32.totalorder %v269, 0
          %vm326 = vcmp.lt.s32.totalorder %v276, 0
          %vm327 = vcmp.lt.s32.totalorder %v283, 0
          %vm328 = vcmp.lt.s32.totalorder %v290, 0
          %vm329 = vcmp.lt.s32.totalorder %v297, 0
          %vm330 = vmand %vm314, %vm298
          %vm331 = vmand %vm315, %vm299
          %vm332 = vmand %vm316, %vm300
          %vm333 = vmand %vm317, %vm301
          %vm334 = vmand %vm318, %vm302
          %vm335 = vmand %vm319, %vm303
          %vm336 = vmand %vm320, %vm304
          %vm337 = vmand %vm321, %vm305
          %vm338 = vmand %vm322, %vm306
          %vm339 = vmand %vm323, %vm307
          %vm340 = vmand %vm324, %vm308
          %vm341 = vmand %vm325, %vm309
          %vm342 = vmand %vm326, %vm310
          %vm343 = vmand %vm327, %vm311
          %vm344 = vmand %vm328, %vm312
          %vm345 = vmand %vm329, %vm313
          %v346 = vadd.s32 %v192, 8
          %v347 = vadd.s32 %v199, 8
          %v348 = vadd.s32 %v206, 8
          %v349 = vadd.s32 %v213, 8
          %v350 = vadd.s32 %v220, 8
          %v351 = vadd.s32 %v227, 8
          %v352 = vadd.s32 %v234, 8
          %v353 = vadd.s32 %v241, 8
          %v354 = vadd.s32 %v248, 8
          %v355 = vadd.s32 %v255, 8
          %v356 = vadd.s32 %v262, 8
          %v357 = vadd.s32 %v269, 8
          %v358 = vadd.s32 %v276, 8
          %v359 = vadd.s32 %v283, 8
          %v360 = vadd.s32 %v290, 8
          %v361 = vadd.s32 %v297, 8
          %v362 = vsel %vm330, %v346, %v192
          %v363 = vsel %vm331, %v347, %v199
          %v364 = vsel %vm332, %v348, %v206
          %v365 = vsel %vm333, %v349, %v213
          %v366 = vsel %vm334, %v350, %v220
          %v367 = vsel %vm335, %v351, %v227
          %v368 = vsel %vm336, %v352, %v234
          %v369 = vsel %vm337, %v353, %v241
          %v370 = vsel %vm338, %v354, %v248
          %v371 = vsel %vm339, %v355, %v255
          %v372 = vsel %vm340, %v356, %v262
          %v373 = vsel %vm341, %v357, %v269
          %v374 = vsel %vm342, %v358, %v276
          %v375 = vsel %vm343, %v359, %v283
          %v376 = vsel %vm344, %v360, %v290
          %v377 = vsel %vm345, %v361, %v297
          %vm378 = vcmp.eq.s32.totalorder %v362, %v185
          %vm379 = vcmp.eq.s32.totalorder %v363, %v185
          %vm380 = vcmp.eq.s32.totalorder %v364, %v185
          %vm381 = vcmp.eq.s32.totalorder %v365, %v185
          %vm382 = vcmp.eq.s32.totalorder %v366, %v185
          %vm383 = vcmp.eq.s32.totalorder %v367, %v185
          %vm384 = vcmp.eq.s32.totalorder %v368, %v185
          %vm385 = vcmp.eq.s32.totalorder %v369, %v185
          %vm386 = vcmp.eq.s32.totalorder %v370, %v185
          %vm387 = vcmp.eq.s32.totalorder %v371, %v185
          %vm388 = vcmp.eq.s32.totalorder %v372, %v185
          %vm389 = vcmp.eq.s32.totalorder %v373, %v185
          %vm390 = vcmp.eq.s32.totalorder %v374, %v185
          %vm391 = vcmp.eq.s32.totalorder %v375, %v185
          %vm392 = vcmp.eq.s32.totalorder %v376, %v185
          %vm393 = vcmp.eq.s32.totalorder %v377, %v185
          %v394 = vsel %vm378, 1, 0
          %v395 = vsel %vm379, 1, 0
          %v396 = vsel %vm380, 1, 0
          %v397 = vsel %vm381, 1, 0
          %v398 = vsel %vm382, 1, 0
          %v399 = vsel %vm383, 1, 0
          %v400 = vsel %vm384, 1, 0
          %v401 = vsel %vm385, 1, 0
          %v402 = vsel %vm386, 1, 0
          %v403 = vsel %vm387, 1, 0
          %v404 = vsel %vm388, 1, 0
          %v405 = vsel %vm389, 1, 0
          %v406 = vsel %vm390, 1, 0
          %v407 = vsel %vm391, 1, 0
          %v408 = vsel %vm392, 1, 0
          %v409 = vsel %vm393, 1, 0
          %v410 = vcvt.s32.f32 %v394
          %v411 = vcvt.s32.f32 %v395
          %v412 = vcvt.s32.f32 %v396
          %v413 = vcvt.s32.f32 %v397
          %v414 = vcvt.s32.f32 %v398
          %v415 = vcvt.s32.f32 %v399
          %v416 = vcvt.s32.f32 %v400
          %v417 = vcvt.s32.f32 %v401
          %v418 = vcvt.s32.f32 %v402
          %v419 = vcvt.s32.f32 %v403
          %v420 = vcvt.s32.f32 %v404
          %v421 = vcvt.s32.f32 %v405
          %v422 = vcvt.s32.f32 %v406
          %v423 = vcvt.s32.f32 %v407
          %v424 = vcvt.s32.f32 %v408
          %v425 = vcvt.s32.f32 %v409
          %v426 = vld [vmem:[#allocation2] sm:$0xf]
          %427 = vmatprep.subr.mxu0 0.0
          %428 = vmatpush1.msra.mxu0 %v410
          %429 = vmatprep.subr.mxu0 0.0
          %430 = vmatpush1.msra.mxu0 %v411
          %431 = vmatprep.subr.mxu0 0.0
          %432 = vmatpush1.msra.mxu0 %v412
          %433 = vmatprep.subr.mxu0 0.0
          %434 = vmatpush1.msra.mxu0 %v413
          %435 = vmatprep.subr.mxu0 0.0
          %436 = vmatpush1.msra.mxu0 %v414
          %437 = vmatprep.subr.mxu0 0.0
          %438 = vmatpush1.msra.mxu0 %v415
          %439 = vmatprep.subr.mxu0 0.0
          %440 = vmatpush1.msra.mxu0 %v416
          %441 = vmatprep.subr.mxu0 0.0
          %442 = vmatpush1.msra.mxu0 %v417
          %443 = vmatprep.subr.mxu0 0.0
          %444 = vmatpush1.msra.mxu0 %v418
          %445 = vmatprep.subr.mxu0 0.0
          %446 = vmatpush1.msra.mxu0 %v419
          %447 = vmatprep.subr.mxu0 0.0
          %448 = vmatpush1.msra.mxu0 %v420
          %449 = vmatprep.subr.mxu0 0.0
          %450 = vmatpush1.msra.mxu0 %v421
          %451 = vmatprep.subr.mxu0 0.0
          %452 = vmatpush1.msra.mxu0 %v422
          %453 = vmatprep.subr.mxu0 0.0
          %454 = vmatpush1.msra.mxu0 %v423
          %455 = vmatprep.subr.mxu0 0.0
          %456 = vmatpush1.msra.mxu0 %v424
          %457 = vmatprep.subr.mxu0 0.0
          %458 = vmatpush1.msra.mxu0 %v425
          %459 = vmatprep.subr.mxu0 0.0
          %460 = vmatpush1.msra.mxu0 0.0
          %461 = vmatprep.subr.mxu0 0.0
          %462 = vmatpush1.msra.mxu0 0.0
          %463 = vmatprep.subr.mxu0 0.0
          %464 = vmatpush1.msra.mxu0 0.0
          %465 = vmatprep.subr.mxu0 0.0
          %466 = vmatpush1.msra.mxu0 0.0
          %467 = vmatprep.subr.mxu0 0.0
          %468 = vmatpush1.msra.mxu0 0.0
          %469 = vmatprep.subr.mxu0 0.0
          %470 = vmatpush1.msra.mxu0 0.0
          %471 = vmatprep.subr.mxu0 0.0
          %472 = vmatpush1.msra.mxu0 0.0
          %473 = vmatprep.subr.mxu0 0.0
          %474 = vmatpush1.msra.mxu0 0.0
          %475 = vmatprep.subr.mxu0 0.0
          %476 = vmatpush1.msra.mxu0 0.0
          %477 = vmatprep.subr.mxu0 0.0
          %478 = vmatpush1.msra.mxu0 0.0
          %479 = vmatprep.subr.mxu0 0.0
          %480 = vmatpush1.msra.mxu0 0.0
          %481 = vmatprep.subr.mxu0 0.0
          %482 = vmatpush1.msra.mxu0 0.0
          %483 = vmatprep.subr.mxu0 0.0
          %484 = vmatpush1.msra.mxu0 0.0
          %485 = vmatprep.subr.mxu0 0.0
          %486 = vmatpush1.msra.mxu0 0.0
          %487 = vmatprep.subr.mxu0 0.0
          %488 = vmatpush1.msra.mxu0 0.0
          %489 = vmatprep.subr.mxu0 0.0
          %490 = vmatpush1.msra.mxu0 0.0
          %491 = vmatprep.mubr.f32.mxu0 0.0
          %492 = vmatmul.mubr.f32.gmra.mrb[0].mxu0 %v426
          %v493 = vpop.f32.mrb[0].mxu0
          %v494 = vadd.f32 0.0, %v493
          %v495 = vpop.f32.mrb[0].mxu0
          %496 = vdwg.mxu0
          %v497 = vmul.f32 %v494, 0.0625
          %vm498 = vcmask 60416
          %499 = vst.msk [vmem:[%s144] sm:$0xf] %vm498, %v497
        $region32: #{average_block.1} parent=23 // pred_fallthru
          _
        %s500 = sand.u32 %s74, 1
        %s501 = scalar_lea.sflag [#allocation4], %s500
        %s502 = sand.u32 %s74, 1
        %s503 = smul.addr %s502, 4
        %s504 = scalar_lea.vmem [#allocation3], %s503
        // Predicated region
        $region33: #{average_block.1} parent=23 // pred_check
          %p505 = pneg %p84
        $region34: #{average_block.1} parent=23 // pred_check_branch
          %507 = sbr.rel (%p505) target = $region36
        $region35: #{average_block.1} parent=23 // pred_region
          %s509 = ssub.s32 64, 64
          %510 = vsyncadd %s501, %s509
          %s511 = sadd.s32 %s21, %s20
          %s512 = smul.addr %s511, 64
          %s513 = scalar_lea.hbm %s1, %s512
          %s515 = sshll.u32 %s504, 4
          %s516 = int_to_ptr.vmem [resolvable:$true] %s515
          %518 = dma.vmem_to_hbm [thread:$0]  %s516, 64, %s513, %s501
        $region36: #{average_block.1} parent=23 // pred_fallthru
          _
      $region24: #{average_block.1} parent=5 // pred_fallthru
        _
      %p519 = scmp.le.s32.totalorder 2, %s10
      // Predicated region
      $region37: #{average_block.1} parent=5 // pred_check
        %p520 = pneg %p519
      $region38: #{average_block.1} parent=5 // pred_check_branch
        %522 = sbr.rel (%p520) target = $region40
      $region39: #{average_block.1} parent=5 // pred_region
        %s523 = ssub.s32 %s10, 2
        // Predicated region
        $region41: #{average_block.1} parent=39 // pred_check
          %p524 = pneg %p90
        $region42: #{average_block.1} parent=39 // pred_check_branch
          %526 = sbr.rel (%p524) target = $region44
        $region43: #{average_block.1} parent=39 // pred_region
          %s527 = sand.u32 %s75, 1
          %s528 = scalar_lea.sflag [#allocation4], %s527
          %s529 = sand.u32 %s75, 1
          %s530 = smul.addr %s529, 4
          %s531 = scalar_lea.vmem [#allocation3], %s530
          %532 = dma.done %s528, 64
        $region44: #{average_block.1} parent=39 // pred_fallthru
          _
      $region40: #{average_block.1} parent=5 // pred_fallthru
        _
    $region6: #{average_block.1} parent=1 // loop_footer
      %s14 = sadd.s32 1, %s10
    $region7: #{average_block.1} parent=1 // loop_footer_branch
      %9 = sbr.rel target = $region3
    $region8: #{average_block.1} parent=1 // loop_exit
      _
    %533 = vsyncpa [#allocation4], 1
    %s534 = scalar_lea.sflag [#allocation4], 1
    %535 = vsyncpa %s534, 1

</llo_original>
